<compile_context>
chip_gen: v7x
topology: tpu7x:2x2x1
jax: 0.10.0
libtpu: 0.0.40
codegen_flags: <defaults>
</compile_context>

<pallas_src>
import functools

import jax
import jax.numpy as jnp
from jax.experimental import pallas as pl
from jax.experimental.pallas import tpu as pltpu


def _round8(n: int) -> int:
    return -(-n // 8) * 8


def _tabl_kernel(x_ref, p_ref, y_ref, *, B, D1, T, O1, O2,
                 off_w1bd, off_w, off_w2, off_bias, off_alpha):
    """Single-program kernel; the whole (tiny) problem lives in VMEM / vregs.

    x_ref: (B*D1, T)      VMEM   batch-major flattened input
    p_ref: (rows, L)      VMEM   packed params: [W1 block-diag | W | W2 | bias_tiled | alpha]
                                 (each segment starts on an 8-sublane-aligned row)
    y_ref: (B*O1, O2)     VMEM   lane-contiguous 2-D output slab
    """
    Xf = x_ref[...]                                            # (B*D1, T)

    # Static, sublane-aligned views into the single packed param buffer (no extra DMAs).
    W1bd = p_ref[off_w1bd:off_w1bd + B * O1, 0:B * D1]         # (B*O1, B*D1)
    W = p_ref[off_w:off_w + T, 0:T]                            # (T, T)
    W2 = p_ref[off_w2:off_w2 + T, 0:O2]                        # (T, O2)
    bias = p_ref[off_bias:off_bias + B * O1, 0:O2]             # (B*O1, O2)  (pre-tiled)
    alpha = p_ref[off_alpha:off_alpha + 1, 0:1]                # (1, 1) broadcast scalar

    # ---- Three batched 2-D matmuls on the MXU (no per-batch loop). ----
    X1 = jnp.dot(W1bd, Xf, preferred_element_type=jnp.float32)  # (B*O1, T)
    E = jnp.dot(X1, W, preferred_element_type=jnp.float32)      # (B*O1, T)

    # ---- Softmax over dim=0 (batch), matching nn.Softmax() default for 3-D input. ----
    # B*O1 reshape stays vreg-aligned because O1 is a multiple of 8 here.
    E3 = E.reshape(B, O1, T)
    m = jnp.max(E3, axis=0, keepdims=True)
    ex = jnp.exp(E3 - m)
    denom = jnp.sum(ex, axis=0, keepdims=True)
    # Exact reciprocal: approx vrcp (~2.4e-4 rel err) is risky vs the 1e-4 tolerance.
    A = (ex * pl.reciprocal(denom, approx=False)).reshape(B * O1, T)

    # tem = alpha*(X1*A) + (1-alpha)*X1  ==  X1 * (1 + alpha*(A - 1))  (one fewer mul)
    tem = X1 * (1.0 + alpha * (A - 1.0))

    X2 = jnp.dot(tem, W2, preferred_element_type=jnp.float32)   # (B*O1, O2)

    # ---- Single dense 2-D store (lane-contiguous); reshape/squeeze happens in wrapper. ----
    y_ref[...] = (X2 + bias).astype(y_ref.dtype)


@jax.jit
def tabl_forward(x, w1, w, alpha, w2, bias):
    """x: (B, D1, T) f32. Returns (B, O1, O2), or (B, O1) if O2 == 1 (torch squeeze)."""
    B, D1, T = x.shape
    O1 = w1.shape[0]
    O2 = w2.shape[1]

    # ---- Hoisted (XLA-side) prep: block-diagonal W1 and one packed param buffer. ----
    w1bd = jnp.kron(jnp.eye(B, dtype=jnp.float32), w1.astype(jnp.float32))  # (B*O1, B*D1)
    bias_tiled = jnp.tile(bias.astype(jnp.float32), (B, 1))                 # (B*O1, O2)

    lane_w = max(B * D1, T, O2)
    off_w1bd = 0
    off_w = off_w1bd + _round8(B * O1)
    off_w2 = off_w + _round8(T)
    off_bias = off_w2 + _round8(T)
    off_alpha = off_bias + _round8(B * O1)
    total_rows = off_alpha + 8

    params = jnp.zeros((total_rows, lane_w), jnp.float32)
    params = params.at[off_w1bd:off_w1bd + B * O1, :B * D1].set(w1bd)
    params = params.at[off_w:off_w + T, :T].set(w.astype(jnp.float32))
    params = params.at[off_w2:off_w2 + T, :O2].set(w2.astype(jnp.float32))
    params = params.at[off_bias:off_bias + B * O1, :O2].set(bias_tiled)
    params = params.at[off_alpha, 0].set(alpha.astype(jnp.float32)[0])

    kernel = functools.partial(
        _tabl_kernel, B=B, D1=D1, T=T, O1=O1, O2=O2,
        off_w1bd=off_w1bd, off_w=off_w, off_w2=off_w2,
        off_bias=off_bias, off_alpha=off_alpha)

    # Single-program call (no grid): the whole problem is a few KiB and latency-bound.
    # With many independent TABL instances, add a "parallel" grid axis to use both
    # v7x TensorCores and amortize the fixed pallas_call overhead.
    y2d = pl.pallas_call(
        kernel,
        out_shape=jax.ShapeDtypeStruct((B * O1, O2), jnp.float32),
        in_specs=[
            pl.BlockSpec(memory_space=pltpu.MemorySpace.VMEM),   # X (flattened, dense 2-D)
            pl.BlockSpec(memory_space=pltpu.MemorySpace.VMEM),   # packed params
        ],
        out_specs=pl.BlockSpec(memory_space=pltpu.MemorySpace.VMEM),
    )(x.reshape(B * D1, T).astype(jnp.float32), params)

    y = y2d.reshape(B, O1, O2)
    if O2 == 1:
        return y.reshape(B, O1)          # torch squeeze(-1) path
    return y


def tabl_reference(x, w1, w, alpha, w2, bias):
    """Pure-JAX reference mirroring the torch forward (softmax over dim=0)."""
    X1 = jnp.einsum("od,bdt->bot", w1, x)
    E = jnp.einsum("bot,ts->bos", X1, w)
    A = jax.nn.softmax(E, axis=0)
    a = alpha[0]
    tem = a * (X1 * A) + (1.0 - a) * X1
    Y = jnp.einsum("bot,ts->bos", tem, w2) + bias[None]
    if w2.shape[1] == 1:
        return jnp.squeeze(Y, axis=-1)
    return Y


if __name__ == "__main__":
    # Shapes consistent with the module: input_dim = (D1, T) = (4, 16),
    # output_dim = (O1, O2) = (8, 4), batch B = 2.
    B, D1, T = 2, 4, 16
    O1, O2 = 8, 4

    key = jax.random.PRNGKey(0)
    kx, k1, kw, ka, k2, kb = jax.random.split(key, 6)

    x = jax.random.normal(kx, (B, D1, T), dtype=jnp.float32)
    w1 = jax.random.normal(k1, (O1, D1), dtype=jnp.float32) * 0.1
    w = jax.random.normal(kw, (T, T), dtype=jnp.float32) * 0.1
    alpha = jax.random.uniform(ka, (1,), dtype=jnp.float32)
    w2 = jax.random.normal(k2, (T, O2), dtype=jnp.float32) * 0.1
    bias = jax.random.normal(kb, (O1, O2), dtype=jnp.float32) * 0.1

    out = tabl_forward(x, w1, w, alpha, w2, bias)
    out = jax.block_until_ready(out)

    ref = tabl_reference(x, w1, w, alpha, w2, bias)
    assert out.shape == (B, O1, O2), out.shape
    assert jnp.allclose(out, ref, rtol=1e-4, atol=1e-4), float(jnp.max(jnp.abs(out - ref)))

    print("KERNEL_OK")
</pallas_src>

<mosaic_0001>
module attributes {stable_mosaic.version = 11 : i64} {
  func.func @_tabl_kernel(%arg0: memref<8x16xf32, #tpu.memory_space<vmem>>, %arg1: memref<72x16xf32, #tpu.memory_space<vmem>>, %arg2: memref<16x4xf32, #tpu.memory_space<vmem>>) attributes {dimension_semantics = [], scalar_prefetch = 0 : i64, scratch_operands = 0 : i64, tpu.core_type = #tpu.core_type<tc>} {
    %c0 = arith.constant 0 : index
    %c0_0 = arith.constant 0 : index
    %0 = vector.load %arg0[%c0, %c0_0] : memref<8x16xf32, #tpu.memory_space<vmem>>, vector<8x16xf32>
    %c0_1 = arith.constant 0 : index
    %c0_2 = arith.constant 0 : index
    %1 = vector.load %arg1[%c0_1, %c0_2] : memref<72x16xf32, #tpu.memory_space<vmem>>, vector<16x8xf32>
    %c16 = arith.constant 16 : index
    %c0_3 = arith.constant 0 : index
    %2 = vector.load %arg1[%c16, %c0_3] : memref<72x16xf32, #tpu.memory_space<vmem>>, vector<16x16xf32>
    %c32 = arith.constant 32 : index
    %c0_4 = arith.constant 0 : index
    %3 = vector.load %arg1[%c32, %c0_4] : memref<72x16xf32, #tpu.memory_space<vmem>>, vector<16x4xf32>
    %c48 = arith.constant 48 : index
    %c0_5 = arith.constant 0 : index
    %4 = vector.load %arg1[%c48, %c0_5] : memref<72x16xf32, #tpu.memory_space<vmem>>, vector<16x4xf32>
    %c64 = arith.constant 64 : index
    %c0_6 = arith.constant 0 : index
    %5 = vector.load %arg1[%c64, %c0_6] : memref<72x16xf32, #tpu.memory_space<vmem>>, vector<1x1xf32>
    %cst = arith.constant dense<0.000000e+00> : vector<16x16xf32>
    %6 = tpu.matmul %1, %0, %cst {dimension_numbers = #tpu.dot_dimension_numbers<[1], [0], [0], [1], [0, 0, 1, 1], [], []>} : vector<16x8xf32>, vector<8x16xf32>, vector<16x16xf32> -> vector<16x16xf32>
    %cst_7 = arith.constant dense<0.000000e+00> : vector<16x16xf32>
    %7 = tpu.matmul %6, %2, %cst_7 {dimension_numbers = #tpu.dot_dimension_numbers<[1], [0], [0], [1], [0, 0, 1, 1], [], []>} : vector<16x16xf32>, vector<16x16xf32>, vector<16x16xf32> -> vector<16x16xf32>
    %8 = vector.shape_cast %7 : vector<16x16xf32> to vector<2x8x16xf32>
    %cst_8 = arith.constant dense<0xFF800000> : vector<8x16xf32>
    %9 = vector.multi_reduction <maximumf>, %8, %cst_8 [0] : vector<2x8x16xf32> to vector<8x16xf32>
    %10 = vector.shape_cast %9 : vector<8x16xf32> to vector<1x8x16xf32>
    %11 = vector.broadcast %10 : vector<1x8x16xf32> to vector<2x8x16xf32>
    %12 = arith.subf %8, %11 : vector<2x8x16xf32>
    %13 = math.exp %12 : vector<2x8x16xf32>
    %cst_9 = arith.constant dense<0.000000e+00> : vector<8x16xf32>
    %14 = vector.multi_reduction <add>, %13, %cst_9 [0] : vector<2x8x16xf32> to vector<8x16xf32>
    %15 = vector.shape_cast %14 : vector<8x16xf32> to vector<1x8x16xf32>
    %16 = tpu.reciprocal %15 : vector<1x8x16xf32> -> vector<1x8x16xf32>
    %17 = vector.broadcast %16 : vector<1x8x16xf32> to vector<2x8x16xf32>
    %18 = arith.mulf %13, %17 : vector<2x8x16xf32>
    %19 = vector.shape_cast %18 : vector<2x8x16xf32> to vector<16x16xf32>
    %cst_10 = arith.constant 1.000000e+00 : f32
    %20 = vector.broadcast %cst_10 : f32 to vector<16x16xf32>
    %21 = arith.subf %19, %20 : vector<16x16xf32>
    %22 = vector.broadcast %5 : vector<1x1xf32> to vector<16x16xf32>
    %23 = arith.mulf %22, %21 : vector<16x16xf32>
    %cst_11 = arith.constant 1.000000e+00 : f32
    %24 = vector.broadcast %cst_11 : f32 to vector<16x16xf32>
    %25 = arith.addf %24, %23 : vector<16x16xf32>
    %26 = arith.mulf %6, %25 : vector<16x16xf32>
    %cst_12 = arith.constant dense<0.000000e+00> : vector<16x4xf32>
    %27 = tpu.matmul %26, %3, %cst_12 {dimension_numbers = #tpu.dot_dimension_numbers<[1], [0], [0], [1], [0, 0, 1, 1], [], []>} : vector<16x16xf32>, vector<16x4xf32>, vector<16x4xf32> -> vector<16x4xf32>
    %28 = arith.addf %27, %4 : vector<16x4xf32>
    %c0_13 = arith.constant 0 : index
    %c0_14 = arith.constant 0 : index
    %29 = vector.load %arg2[%c0_13, %c0_14] : memref<16x4xf32, #tpu.memory_space<vmem>>, vector<16x4xf32>
    tpu.vector_store %arg2[%c0_13, %c0_14], %28 {strides = array<i32>} : memref<16x4xf32, #tpu.memory_space<vmem>>, vector<16x4xf32>,
    return
  }
}

</mosaic_0001>

<llo_original>
// kernel: tabl_forward.1
$region0: #{tabl_forward.1}
  #allocation0 [shape = 'u32[]', space=smem, size = 0x4, offset = 0x4, fixed_abs, tag = 'smem constant byte address 0x4 - core index']
  #allocation1 [shape = 'u32[144,128]{1,0:T(1,128)}', space=vmem, size = 0x12000, scoped, tag = 'internal scratch']
  %s0 = inlined_call_operand.vmem [shape: f32[8,16], index: 0, kind: input, shape index: {}]
  %s1 = inlined_call_operand.vmem [shape: f32[72,16], index: 1, kind: input, shape index: {}]
  %s2 = inlined_call_operand.vmem [shape: f32[16,4], index: 2, kind: output, shape index: {}]
  %s3 = sld [smem:[#allocation0]]
  $region18: #{tabl_forward.1} parent=0
    _
  %s5 = ssub.s32 1, %s3
  %s6 = scalar_select 0, %s5, %s3
  // Predicated region
  $region2: #{tabl_forward.1} parent=0 // pred_check
    _
  $region3: #{tabl_forward.1} parent=0 // pred_check_branch
    %8 = sbr.rel (0) target = $region5
  $region4: #{tabl_forward.1} parent=0 // pred_region
    _
  $region5: #{tabl_forward.1} parent=0 // pred_fallthru
    _
  // Predicated region
  $region6: #{tabl_forward.1} parent=0 // pred_check
    _
  $region7: #{tabl_forward.1} parent=0 // pred_check_branch
    %10 = sbr.rel (0) target = $region9
  $region8: #{tabl_forward.1} parent=0 // pred_region
    _
  $region9: #{tabl_forward.1} parent=0 // pred_fallthru
    _
  %v11 = vld [vmem:[%s0] sm:$0xff]
  %v12 = vld [vmem:[%s1] sm:$0xff]
  %v13 = vld [vmem:[%s1 + $0x8] sm:$0xff]
  %v14 = vld [vmem:[%s1 + $0x10] sm:$0xff]
  %v15 = vld [vmem:[%s1 + $0x18] sm:$0xff]
  %v16 = vld [vmem:[%s1 + $0x20] sm:$0xff]
  %v17 = vld [vmem:[%s1 + $0x28] sm:$0xff]
  %v18 = vld [vmem:[%s1 + $0x30] sm:$0xff]
  %v19 = vld [vmem:[%s1 + $0x38] sm:$0xff]
  %v20 = vld [vmem:[%s1 + $0x40] sm:$0x1]
  %vm21 = vcmask 64512
  %v23 = vsel %vm21, %v12, 0
  %v26 = vsel %vm21, %v13, 0
  %28 = vmatprep.subr.mxu0 0.0
  %29 = vmatpush1.msra.mxu0 %v11
  %30 = vmatprep.subr.mxu0 0.0
  %31 = vmatpush1.msra.mxu0 0.0
  %32 = vmatprep.subr.mxu0 0.0
  %33 = vmatpush1.msra.mxu0 0.0
  %34 = vmatprep.subr.mxu0 0.0
  %35 = vmatpush1.msra.mxu0 0.0
  %36 = vmatprep.subr.mxu0 0.0
  %37 = vmatpush1.msra.mxu0 0.0
  %38 = vmatprep.subr.mxu0 0.0
  %39 = vmatpush1.msra.mxu0 0.0
  %40 = vmatprep.subr.mxu0 0.0
  %41 = vmatpush1.msra.mxu0 0.0
  %42 = vmatprep.subr.mxu0 0.0
  %43 = vmatpush1.msra.mxu0 0.0
  %44 = vmatprep.subr.mxu0 0.0
  %45 = vmatpush1.msra.mxu0 0.0
  %46 = vmatprep.subr.mxu0 0.0
  %47 = vmatpush1.msra.mxu0 0.0
  %48 = vmatprep.subr.mxu0 0.0
  %49 = vmatpush1.msra.mxu0 0.0
  %50 = vmatprep.subr.mxu0 0.0
  %51 = vmatpush1.msra.mxu0 0.0
  %52 = vmatprep.subr.mxu0 0.0
  %53 = vmatpush1.msra.mxu0 0.0
  %54 = vmatprep.subr.mxu0 0.0
  %55 = vmatpush1.msra.mxu0 0.0
  %56 = vmatprep.subr.mxu0 0.0
  %57 = vmatpush1.msra.mxu0 0.0
  %58 = vmatprep.subr.mxu0 0.0
  %59 = vmatpush1.msra.mxu0 0.0
  %60 = vmatprep.subr.mxu0 0.0
  %61 = vmatpush1.msra.mxu0 0.0
  %62 = vmatprep.subr.mxu0 0.0
  %63 = vmatpush1.msra.mxu0 0.0
  %64 = vmatprep.subr.mxu0 0.0
  %65 = vmatpush1.msra.mxu0 0.0
  %66 = vmatprep.subr.mxu0 0.0
  %67 = vmatpush1.msra.mxu0 0.0
  %68 = vmatprep.subr.mxu0 0.0
  %69 = vmatpush1.msra.mxu0 0.0
  %70 = vmatprep.subr.mxu0 0.0
  %71 = vmatpush1.msra.mxu0 0.0
  %72 = vmatprep.subr.mxu0 0.0
  %73 = vmatpush1.msra.mxu0 0.0
  %74 = vmatprep.subr.mxu0 0.0
  %75 = vmatpush1.msra.mxu0 0.0
  %76 = vmatprep.subr.mxu0 0.0
  %77 = vmatpush1.msra.mxu0 0.0
  %78 = vmatprep.subr.mxu0 0.0
  %79 = vmatpush1.msra.mxu0 0.0
  %80 = vmatprep.subr.mxu0 0.0
  %81 = vmatpush1.msra.mxu0 0.0
  %82 = vmatprep.subr.mxu0 0.0
  %83 = vmatpush1.msra.mxu0 0.0
  %84 = vmatprep.subr.mxu0 0.0
  %85 = vmatpush1.msra.mxu0 0.0
  %86 = vmatprep.subr.mxu0 0.0
  %87 = vmatpush1.msra.mxu0 0.0
  %88 = vmatprep.subr.mxu0 0.0
  %89 = vmatpush1.msra.mxu0 0.0
  %90 = vmatprep.subr.mxu0 0.0
  %91 = vmatpush1.msra.mxu0 0.0
  %92 = vmatprep.mubr.f32.mxu0 0.0
  %93 = vmatmul.mubr.f32.gmra.mrb[0].mxu0 %v23
  %v94 = vpop.f32.mrb[0].mxu0
  %v95 = vadd.f32 0.0, %v94
  %v96 = vpop.f32.mrb[0].mxu0
  %97 = vmatprep.mubr.f32.mxu0 0.0
  %98 = vmatmul.mubr.f32.gmra.mrb[0].mxu0 %v26
  %v99 = vpop.f32.mrb[0].mxu0
  %v100 = vadd.f32 0.0, %v99
  %v101 = vpop.f32.mrb[0].mxu0
  %102 = vdwg.mxu0
  %vm103 = vcmask 130048
  %v105 = vsel %vm103, %v95, 0
  %v108 = vsel %vm103, %v100, 0
  %110 = vmatprep.subr.mxu0 0.0
  %111 = vmatpush1.msra.mxu0 %v14
  %112 = vmatprep.subr.mxu0 0.0
  %113 = vmatpush1.msra.mxu0 %v15
  %114 = vmatprep.subr.mxu0 0.0
  %115 = vmatpush1.msra.mxu0 0.0
  %116 = vmatprep.subr.mxu0 0.0
  %117 = vmatpush1.msra.mxu0 0.0
  %118 = vmatprep.subr.mxu0 0.0
  %119 = vmatpush1.msra.mxu0 0.0
  %120 = vmatprep.subr.mxu0 0.0
  %121 = vmatpush1.msra.mxu0 0.0
  %122 = vmatprep.subr.mxu0 0.0
  %123 = vmatpush1.msra.mxu0 0.0
  %124 = vmatprep.subr.mxu0 0.0
  %125 = vmatpush1.msra.mxu0 0.0
  %126 = vmatprep.subr.mxu0 0.0
  %127 = vmatpush1.msra.mxu0 0.0
  %128 = vmatprep.subr.mxu0 0.0
  %129 = vmatpush1.msra.mxu0 0.0
  %130 = vmatprep.subr.mxu0 0.0
  %131 = vmatpush1.msra.mxu0 0.0
  %132 = vmatprep.subr.mxu0 0.0
  %133 = vmatpush1.msra.mxu0 0.0
  %134 = vmatprep.subr.mxu0 0.0
  %135 = vmatpush1.msra.mxu0 0.0
  %136 = vmatprep.subr.mxu0 0.0
  %137 = vmatpush1.msra.mxu0 0.0
  %138 = vmatprep.subr.mxu0 0.0
  %139 = vmatpush1.msra.mxu0 0.0
  %140 = vmatprep.subr.mxu0 0.0
  %141 = vmatpush1.msra.mxu0 0.0
  %142 = vmatprep.subr.mxu0 0.0
  %143 = vmatpush1.msra.mxu0 0.0
  %144 = vmatprep.subr.mxu0 0.0
  %145 = vmatpush1.msra.mxu0 0.0
  %146 = vmatprep.subr.mxu0 0.0
  %147 = vmatpush1.msra.mxu0 0.0
  %148 = vmatprep.subr.mxu0 0.0
  %149 = vmatpush1.msra.mxu0 0.0
  %150 = vmatprep.subr.mxu0 0.0
  %151 = vmatpush1.msra.mxu0 0.0
  %152 = vmatprep.subr.mxu0 0.0
  %153 = vmatpush1.msra.mxu0 0.0
  %154 = vmatprep.subr.mxu0 0.0
  %155 = vmatpush1.msra.mxu0 0.0
  %156 = vmatprep.subr.mxu0 0.0
  %157 = vmatpush1.msra.mxu0 0.0
  %158 = vmatprep.subr.mxu0 0.0
  %159 = vmatpush1.msra.mxu0 0.0
  %160 = vmatprep.subr.mxu0 0.0
  %161 = vmatpush1.msra.mxu0 0.0
  %162 = vmatprep.subr.mxu0 0.0
  %163 = vmatpush1.msra.mxu0 0.0
  %164 = vmatprep.subr.mxu0 0.0
  %165 = vmatpush1.msra.mxu0 0.0
  %166 = vmatprep.subr.mxu0 0.0
  %167 = vmatpush1.msra.mxu0 0.0
  %168 = vmatprep.subr.mxu0 0.0
  %169 = vmatpush1.msra.mxu0 0.0
  %170 = vmatprep.subr.mxu0 0.0
  %171 = vmatpush1.msra.mxu0 0.0
  %172 = vmatprep.subr.mxu0 0.0
  %173 = vmatpush1.msra.mxu0 0.0
  %174 = vmatprep.mubr.f32.mxu0 0.0
  %175 = vmatmul.mubr.f32.gmra.mrb[0].mxu0 %v105
  %v176 = vpop.f32.mrb[0].mxu0
  %v177 = vadd.f32 0.0, %v176
  %v178 = vpop.f32.mrb[0].mxu0
  %179 = vmatprep.mubr.f32.mxu0 0.0
  %180 = vmatmul.mubr.f32.gmra.mrb[0].mxu0 %v108
  %v181 = vpop.f32.mrb[0].mxu0
  %v182 = vadd.f32 0.0, %v181
  %v183 = vpop.f32.mrb[0].mxu0
  %184 = vdwg.mxu0
  %v185 = vsel %vm103, %v177, -inf
  %v186 = vsel %vm103, %v182, -inf
  %v187 = vmax.f32 %v185, %v186
  %v188 = vsub.f32 %v177, %v187
  %v189 = vsub.f32 %v182, %v187
  %v190 = vmul.f32 %v188, 1.442695
  %v191 = vpow.pop %v190
  %v192 = vmul.f32 %v189, 1.442695
  %v193 = vpow.pop %v192
  %v194 = vsel %vm103, %v191, 0.0
  %v195 = vsel %vm103, %v193, 0.0
  %v196 = vadd.f32 %v194, %v195
  %v197 = vrcp.pop %v196
  %v198 = vmul.f32 %v191, %v197
  %v199 = vmul.f32 %v193, %v197
  %v200 = vsub.f32 %v198, 1.0
  %v201 = vsub.f32 %v199, 1.0
  %s203 = vtos %v20
  %v204 = vstv %s203
  %v206 = vmul.f32 %v204, %v200
  %v207 = vmul.f32 %v204, %v201
  %v208 = vadd.f32 %v206, 1.0
  %v209 = vadd.f32 %v207, 1.0
  %v210 = vmul.f32 %v95, %v208
  %v211 = vmul.f32 %v100, %v209
  %v213 = vsel %vm103, %v210, 0
  %v216 = vsel %vm103, %v211, 0
  %218 = vmatprep.subr.mxu0 0.0
  %219 = vmatpush1.msra.mxu0 %v16
  %220 = vmatprep.subr.mxu0 0.0
  %221 = vmatpush1.msra.mxu0 %v17
  %222 = vmatprep.subr.mxu0 0.0
  %223 = vmatpush1.msra.mxu0 0.0
  %224 = vmatprep.subr.mxu0 0.0
  %225 = vmatpush1.msra.mxu0 0.0
  %226 = vmatprep.subr.mxu0 0.0
  %227 = vmatpush1.msra.mxu0 0.0
  %228 = vmatprep.subr.mxu0 0.0
  %229 = vmatpush1.msra.mxu0 0.0
  %230 = vmatprep.subr.mxu0 0.0
  %231 = vmatpush1.msra.mxu0 0.0
  %232 = vmatprep.subr.mxu0 0.0
  %233 = vmatpush1.msra.mxu0 0.0
  %234 = vmatprep.subr.mxu0 0.0
  %235 = vmatpush1.msra.mxu0 0.0
  %236 = vmatprep.subr.mxu0 0.0
  %237 = vmatpush1.msra.mxu0 0.0
  %238 = vmatprep.subr.mxu0 0.0
  %239 = vmatpush1.msra.mxu0 0.0
  %240 = vmatprep.subr.mxu0 0.0
  %241 = vmatpush1.msra.mxu0 0.0
  %242 = vmatprep.subr.mxu0 0.0
  %243 = vmatpush1.msra.mxu0 0.0
  %244 = vmatprep.subr.mxu0 0.0
  %245 = vmatpush1.msra.mxu0 0.0
  %246 = vmatprep.subr.mxu0 0.0
  %247 = vmatpush1.msra.mxu0 0.0
  %248 = vmatprep.subr.mxu0 0.0
  %249 = vmatpush1.msra.mxu0 0.0
  %250 = vmatprep.subr.mxu0 0.0
  %251 = vmatpush1.msra.mxu0 0.0
  %252 = vmatprep.subr.mxu0 0.0
  %253 = vmatpush1.msra.mxu0 0.0
  %254 = vmatprep.subr.mxu0 0.0
  %255 = vmatpush1.msra.mxu0 0.0
  %256 = vmatprep.subr.mxu0 0.0
  %257 = vmatpush1.msra.mxu0 0.0
  %258 = vmatprep.subr.mxu0 0.0
  %259 = vmatpush1.msra.mxu0 0.0
  %260 = vmatprep.subr.mxu0 0.0
  %261 = vmatpush1.msra.mxu0 0.0
  %262 = vmatprep.subr.mxu0 0.0
  %263 = vmatpush1.msra.mxu0 0.0
  %264 = vmatprep.subr.mxu0 0.0
  %265 = vmatpush1.msra.mxu0 0.0
  %266 = vmatprep.subr.mxu0 0.0
  %267 = vmatpush1.msra.mxu0 0.0
  %268 = vmatprep.subr.mxu0 0.0
  %269 = vmatpush1.msra.mxu0 0.0
  %270 = vmatprep.subr.mxu0 0.0
  %271 = vmatpush1.msra.mxu0 0.0
  %272 = vmatprep.subr.mxu0 0.0
  %273 = vmatpush1.msra.mxu0 0.0
  %274 = vmatprep.subr.mxu0 0.0
  %275 = vmatpush1.msra.mxu0 0.0
  %276 = vmatprep.subr.mxu0 0.0
  %277 = vmatpush1.msra.mxu0 0.0
  %278 = vmatprep.subr.mxu0 0.0
  %279 = vmatpush1.msra.mxu0 0.0
  %280 = vmatprep.subr.mxu0 0.0
  %281 = vmatpush1.msra.mxu0 0.0
  %282 = vmatprep.mubr.f32.mxu0 0.0
  %283 = vmatmul.mubr.f32.gmra.mrb[0].mxu0 %v213
  %v284 = vpop.f32.mrb[0].mxu0
  %v285 = vadd.f32 %v18, %v284
  %v286 = vpop.f32.mrb[0].mxu0
  %287 = vmatprep.mubr.f32.mxu0 0.0
  %288 = vmatmul.mubr.f32.gmra.mrb[0].mxu0 %v216
  %v289 = vpop.f32.mrb[0].mxu0
  %v290 = vadd.f32 %v19, %v289
  %v291 = vpop.f32.mrb[0].mxu0
  %292 = vdwg.mxu0
  %vm293 = vcmask 31744
  %294 = vst.msk [vmem:[%s2] sm:$0xff] %vm293, %v285
  %295 = vst.msk [vmem:[%s2 + $0x8] sm:$0xff] %vm293, %v290
  // Predicated region
  $region10: #{tabl_forward.1} parent=0 // pred_check
    _
  $region11: #{tabl_forward.1} parent=0 // pred_check_branch
    %297 = sbr.rel (0) target = $region13
  $region12: #{tabl_forward.1} parent=0 // pred_region
    _
  $region13: #{tabl_forward.1} parent=0 // pred_fallthru
    _
  // Predicated region
  $region14: #{tabl_forward.1} parent=0 // pred_check
    _
  $region15: #{tabl_forward.1} parent=0 // pred_check_branch
    %299 = sbr.rel (0) target = $region17
  $region16: #{tabl_forward.1} parent=0 // pred_region
    _
  $region17: #{tabl_forward.1} parent=0 // pred_fallthru
    _

</llo_original>
